<compile_context>
chip_gen: v7x
topology: tpu7x:2x2x1
jax: 0.10.0
libtpu: 0.0.40
codegen_flags: <defaults>
</compile_context>

<pallas_src>
import functools

import jax
import jax.numpy as jnp
from jax.experimental import pallas as pl
from jax.experimental.pallas import tpu as pltpu

_EPS = 1e-12  # matches torch.nn.functional.normalize default eps


def _round_up(x, m):
    return ((x + m - 1) // m) * m


def _weight_norms_kernel(w_ref, norms_ref, *, normalize):
    """Per-tile row L2 norms, emitted lane-dense as an (8, tile_n) block.

    w_ref:     (tile_n, D) tile of the weight matrix (rows = classes).
    norms_ref: (8, tile_n) f32; all 8 rows identical = per-class norms.
    """
    tile_n, d = w_ref.shape
    n_full = d // 128
    rem = d - n_full * 128

    def reduce_to_lanes(sq):
        # Cross-lane row reduction on the MXU: ones(8, K) @ sq^T -> (8, tile_n).
        # This both reduces over K and lands the per-class sums on the *lane*
        # axis, so the only store per grid step is a lane-dense block.
        ones = jnp.ones((8, sq.shape[1]), jnp.float32)
        return jax.lax.dot_general(
            ones, sq,
            dimension_numbers=(((1,), (1,)), ((), ())),
            preferred_element_type=jnp.float32)

    # VPU pre-reduction: fold the D axis 128 lanes at a time into a single
    # (tile_n, 128) f32 accumulator (exact f32 adds). Static 128-aligned ref
    # slices cut exactly on vreg boundaries (no relayout), and only the small
    # accumulator / tail ever streams through the MXU (~D/128x less than
    # feeding the whole squared tile through a transposed matmul).
    partial = None
    for c in range(n_full):
        chunk = w_ref[:, c * 128:(c + 1) * 128].astype(jnp.float32)
        sq = chunk * chunk
        partial = sq if partial is None else partial + sq

    sq_sums = reduce_to_lanes(partial) if partial is not None else None
    if rem > 0:
        tail = w_ref[:, n_full * 128:].astype(jnp.float32)
        tail_sums = reduce_to_lanes(tail * tail)
        sq_sums = tail_sums if sq_sums is None else sq_sums + tail_sums

    # NOTE: the final <=128-wide MXU reduce runs at default precision (bf16
    # operand truncation, <~1e-3 rel err); the bulk of the reduction above is
    # exact f32 on the VPU. Padded tail rows of the last tile may hold garbage
    # (possibly NaN after sqrt); the wrapper slices them off.
    row_norm = jnp.sqrt(sq_sums)                              # (8, tile_n)
    if normalize:
        # ||normalize(w_i)||_2 == ||w_i|| / max(||w_i||, eps): exactly 1.0 for
        # any row with ||w_i|| >= eps and 0.0 for all-zero rows, matching
        # torch.nn.functional.normalize followed by torch.norm.
        norms_ref[...] = row_norm / jnp.maximum(row_norm, _EPS)
    else:
        norms_ref[...] = row_norm


def base_weight_regularizer_forward(weights, normalize_weights=True):
    """Returns (loss, avg_weight_norm, weight_norms); forward() returns `loss`."""
    num_classes, emb_size = weights.shape
    itemsize = jnp.dtype(weights.dtype).itemsize
    # Sublane-packing granule: 8 rows for f32, 16 for bf16, 32 for int8/fp8.
    granule = 8 * max(1, 4 // itemsize)

    # --- per-generation VMEM budget --------------------------------------
    try:
        vmem_cap = int(pltpu.get_tpu_info().vmem_capacity_bytes)
    except Exception:  # no TPU info available -> assume the smallest (v7x) VMEM
        vmem_cap = 64 << 20
    if vmem_cap >= (96 << 20):       # v5e / v6e: 128 MiB of VMEM per core
        tile_budget_bytes = 80 << 20
        vmem_limit = 100 << 20
    else:                            # v7x: 64 MiB per core -> keep 16 MiB headroom
        tile_budget_bytes = 36 << 20
        vmem_limit = 48 << 20

    # Bytes per weight row that scale with tile_n: double-buffered input block,
    # f32 chunk temps + (tile_n, 128) accumulator, double-buffered (8, tile_n)
    # output block.
    per_row_bytes = 2 * emb_size * itemsize + 4 * 128 * 4 + 2 * 8 * 4
    tile_budget_rows = max(granule, tile_budget_bytes // per_row_bytes)

    # Tile policy: as large as the budget allows (amortizes the ~0.35 us grid
    # step overhead), never larger than the data, and always >= 2 tiles when
    # the rows are splittable so both v7x TensorCores get work.
    tile_n = min(int(tile_budget_rows), _round_up(num_classes, granule))
    if num_classes > granule:
        tile_n = min(tile_n, _round_up(pl.cdiv(num_classes, 2), granule))
    tile_n = max(granule, (tile_n // granule) * granule)
    num_tiles = pl.cdiv(num_classes, tile_n)

    # Best effort: an even tile count balances the two v7x TensorCores.
    if num_tiles > 1 and num_tiles % 2 == 1:
        alt_tile_n = _round_up(pl.cdiv(num_classes, num_tiles + 1), granule)
        if alt_tile_n >= granule and pl.cdiv(num_classes, alt_tile_n) % 2 == 0:
            tile_n = alt_tile_n
            num_tiles = pl.cdiv(num_classes, alt_tile_n)

    norms_slab = pl.pallas_call(
        functools.partial(_weight_norms_kernel, normalize=normalize_weights),
        out_shape=jax.ShapeDtypeStruct((num_tiles * 8, tile_n), jnp.float32),
        grid=(num_tiles,),
        in_specs=[pl.BlockSpec((tile_n, emb_size), lambda i: (i, 0))],
        out_specs=pl.BlockSpec((8, tile_n), lambda i: (i, 0)),
        compiler_params=pltpu.CompilerParams(
            dimension_semantics=("parallel",),
            vmem_limit_bytes=int(vmem_limit)),
    )(weights)

    # Each (8, tile_n) block holds 8 identical rows of per-class norms; take
    # row 0 of every block, flatten, and drop padded classes (only the last
    # tile can be partial, so padding sits exactly at the flat tail).
    weight_norms = (norms_slab.reshape(num_tiles, 8, tile_n)[:, 0, :]
                    .reshape(-1)[:num_classes])
    avg_weight_norm = jnp.mean(weight_norms)

    # TODO(synk): compute_loss() is abstract in BaseWeightRegularizer; the base
    # forward falls back to sum(weights * 0), i.e. loss == 0.0.
    loss = jnp.zeros((), jnp.float32)
    return loss, avg_weight_norm, weight_norms


if __name__ == "__main__":
    key = jax.random.PRNGKey(0)
    num_classes, embedding_size = 16, 32
    weights = jax.random.normal(key, (num_classes, embedding_size),
                                dtype=jnp.float32)

    loss, avg_weight_norm, weight_norms = base_weight_regularizer_forward(weights)
    jax.block_until_ready((loss, avg_weight_norm, weight_norms))

    # Reference (default normalize_weights=True path).
    w_n = weights / jnp.maximum(
        jnp.linalg.norm(weights, axis=1, keepdims=True), _EPS)
    ref_norms = jnp.linalg.norm(w_n, axis=1)
    ref_avg = jnp.mean(ref_norms)
    assert jnp.allclose(loss, 0.0, atol=1e-6), loss
    assert jnp.allclose(weight_norms, ref_norms, atol=1e-5)
    assert jnp.allclose(avg_weight_norm, ref_avg, atol=1e-5), (avg_weight_norm, ref_avg)

    # Non-divisible row count + normalize_weights=False path (padded last block).
    w2 = jax.random.normal(jax.random.PRNGKey(1), (30, 32), dtype=jnp.float32)
    loss2, avg2, norms2 = base_weight_regularizer_forward(
        w2, normalize_weights=False)
    jax.block_until_ready((loss2, avg2, norms2))
    ref2 = jnp.linalg.norm(w2, axis=1)
    assert jnp.allclose(loss2, 0.0, atol=1e-6)
    assert jnp.allclose(norms2, ref2, rtol=5e-3, atol=1e-3)
    assert jnp.allclose(avg2, jnp.mean(ref2), rtol=5e-3, atol=1e-3)

    # Embedding size > 128 (exercises the chunked VPU pre-reduction + tail).
    w3 = jax.random.normal(jax.random.PRNGKey(2), (64, 300), dtype=jnp.float32)
    loss3, avg3, norms3 = base_weight_regularizer_forward(
        w3, normalize_weights=False)
    jax.block_until_ready((loss3, avg3, norms3))
    ref3 = jnp.linalg.norm(w3, axis=1)
    assert jnp.allclose(loss3, 0.0, atol=1e-6)
    assert jnp.allclose(norms3, ref3, rtol=5e-3, atol=1e-3)
    assert jnp.allclose(avg3, jnp.mean(ref3), rtol=5e-3, atol=1e-3)

    print("KERNEL_OK")
</pallas_src>

<mosaic_0001>
module attributes {stable_mosaic.version = 11 : i64} {
  func.func @_weight_norms_kernel(%arg0: i32, %arg1: memref<8x32xf32, #tpu.memory_space<vmem>>, %arg2: memref<8x8xf32, #tpu.memory_space<vmem>>) attributes {dimension_semantics = [#tpu.dimension_semantics<parallel>], iteration_bounds = array<i64: 2>, scalar_prefetch = 0 : i64, scratch_operands = 0 : i64, tpu.core_type = #tpu.core_type<tc>, window_params = [{transform_indices = @transform_0, window_bounds = array<i64: 8, 32>}, {transform_indices = @transform_1, window_bounds = array<i64: 8, 8>}]} {
    %c0 = arith.constant 0 : index
    %c0_0 = arith.constant 0 : index
    %0 = vector.load %arg1[%c0, %c0_0] : memref<8x32xf32, #tpu.memory_space<vmem>>, vector<8x32xf32>
    %1 = arith.mulf %0, %0 : vector<8x32xf32>
    %cst = arith.constant 1.000000e+00 : f32
    %2 = vector.broadcast %cst : f32 to vector<8x32xf32>
    %cst_1 = arith.constant dense<0.000000e+00> : vector<8x8xf32>
    %3 = tpu.matmul %2, %1, %cst_1 {dimension_numbers = #tpu.dot_dimension_numbers<[1], [1], [0], [0], [0, 0, 1, 0], [], []>} : vector<8x32xf32>, vector<8x32xf32>, vector<8x8xf32> -> vector<8x8xf32>
    %4 = math.sqrt %3 : vector<8x8xf32>
    %cst_2 = arith.constant 9.99999996E-13 : f32
    %5 = vector.broadcast %cst_2 : f32 to vector<8x8xf32>
    %6 = arith.maximumf %4, %5 : vector<8x8xf32>
    %7 = arith.divf %4, %6 : vector<8x8xf32>
    %c0_3 = arith.constant 0 : index
    %c0_4 = arith.constant 0 : index
    %8 = vector.load %arg2[%c0_3, %c0_4] : memref<8x8xf32, #tpu.memory_space<vmem>>, vector<8x8xf32>
    tpu.vector_store %arg2[%c0_3, %c0_4], %7 {strides = array<i32>} : memref<8x8xf32, #tpu.memory_space<vmem>>, vector<8x8xf32>,
    return
  }
  func.func @transform_0(%arg0: i32) -> (i32, i32) {
    %c0_i32 = arith.constant 0 : i32
    %c0_i32_0 = arith.constant 0 : i32
    return %arg0, %c0_i32 : i32, i32
  }
  func.func @transform_1(%arg0: i32) -> (i32, i32) {
    %c0_i32 = arith.constant 0 : i32
    %c0_i32_0 = arith.constant 0 : i32
    return %arg0, %c0_i32 : i32, i32
  }
}

</mosaic_0001>

<llo_original>
// kernel: tpu_custom_call.1
$region0: #{tpu_custom_call.1}
  #allocation0 [shape = 'u32[]', space=smem, size = 0x4, offset = 0x4, fixed_abs, tag = 'smem constant byte address 0x4 - core index']
  #allocation1 [shape = 'u32[144,128]{1,0:T(1,128)}', space=vmem, size = 0x12000, scoped, tag = 'internal scratch']
  %s0 = inlined_call_operand.hbm [shape: f32[16,32], index: 0, kind: input, shape index: {}]
  %s1 = inlined_call_operand.vmem [shape: f32[16,8], index: 1, kind: output, shape index: {}]
  %s2 = sld [smem:[#allocation0]]
  $region41: #{tpu_custom_call.1} parent=0
    _
  %s4 = ssub.s32 1, %s2
  %s5 = scalar_select 0, %s4, %s2
  $region1: #{tpu_custom_call.1} parent=0
    #allocation2 [shape = 'u8[8192]{0}', space=vmem, size = 0x2000, scoped, tag = 'input window, operand 0']
    #allocation3 [shape = 's32[2]{0}', space=sflag, size = 0x8, scoped, tag = 'scoped memory for tpu_custom_call.1']
    %6 = vsyncpa [#allocation3], 0
    %s7 = scalar_lea.sflag [#allocation3], 1
    %8 = vsyncpa %s7, 0
    loop: start=0, step=1, limit=4
    $region2: #{tpu_custom_call.1} parent=1 // loop_pre_header
      _
    $region3: #{tpu_custom_call.1} parent=1 // loop_header
      %s10 = sphi 0, %s14
      %p11 = scmp.ge.s32.totalorder %s10, 4
      %s20 = sphi 0, %s22
      %s23 = sphi 0, %s20
      %s24 = sphi 0, %s23
      %s40 = sphi 0, %s24
      %s46 = sphi 0, %s48
      %s49 = sphi 0, %s46
      %s50 = sphi 0, %s49
      %s66 = sphi 0, %s50
    $region4: #{tpu_custom_call.1} parent=1 // loop_header_branch
      %13 = sbr.rel (%p11) target = $region8
    $region5: #{tpu_custom_call.1} parent=1 // loop_body
      %s15 = ssub.s32 %s10, 1
      %s16 = ssub.s32 %s10, 2
      %s17 = sadd.s32 %s10, 1
      %s18 = ssub.s32 %s10, %s17
      %p19 = scmp.eq.s32.totalorder %s18, 0
      %s21 = sadd.s32 %s20, 1
      %s22 = scalar_select %p19, %s20, %s21
      %p25 = pneg %p19
      %p26 = scmp.eq.s32.totalorder %s10, 1
      %p27 = por %p25, %p26
      %p28 = scmp.ne.s32.totalorder %s20, %s23
      %p29 = scmp.eq.s32.totalorder %s10, 0
      %p30 = por %p28, %p29
      %p31 = scmp.ne.s32.totalorder %s20, %s23
      %p32 = scmp.eq.s32.totalorder %s15, 1
      %p33 = por %p31, %p32
      %p34 = scmp.ne.s32.totalorder %s23, %s24
      %p35 = scmp.eq.s32.totalorder %s15, 0
      %p36 = por %p34, %p35
      %p37 = scmp.ne.s32.totalorder %s23, %s24
      %p38 = scmp.eq.s32.totalorder %s16, 1
      %p39 = por %p37, %p38
      %p41 = scmp.ne.s32.totalorder %s24, %s40
      %p42 = scmp.eq.s32.totalorder %s16, 0
      %p43 = por %p41, %p42
      %s44 = ssub.s32 %s10, %s17
      %p45 = scmp.eq.s32.totalorder %s44, 0
      %s47 = sadd.s32 %s46, 1
      %s48 = scalar_select %p45, %s46, %s47
      %p51 = pneg %p45
      %p52 = scmp.eq.s32.totalorder %s10, 1
      %p53 = por %p51, %p52
      %p54 = scmp.ne.s32.totalorder %s46, %s49
      %p55 = scmp.eq.s32.totalorder %s10, 0
      %p56 = por %p54, %p55
      %p57 = scmp.ne.s32.totalorder %s46, %s49
      %p58 = scmp.eq.s32.totalorder %s15, 1
      %p59 = por %p57, %p58
      %p60 = scmp.ne.s32.totalorder %s49, %s50
      %p61 = scmp.eq.s32.totalorder %s15, 0
      %p62 = por %p60, %p61
      %p63 = scmp.ne.s32.totalorder %s49, %s50
      %p64 = scmp.eq.s32.totalorder %s16, 1
      %p65 = por %p63, %p64
      %p67 = scmp.ne.s32.totalorder %s50, %s66
      %p68 = scmp.eq.s32.totalorder %s16, 0
      %p69 = por %p67, %p68
      %p70 = scmp.le.s32.totalorder 1, %s10
      %p71 = scmp.lt.s32.totalorder %s10, 3
      %p72 = pnand %p70, %p71
      %p73 = pneg %p72
      // Predicated region
      $region9: #{tpu_custom_call.1} parent=5 // pred_check
        _
      $region10: #{tpu_custom_call.1} parent=5 // pred_check_branch
        %75 = sbr.rel (%p72) target = $region12
      $region11: #{tpu_custom_call.1} parent=5 // pred_region
        %s76 = ssub.s32 %s10, 1
      $region12: #{tpu_custom_call.1} parent=5 // pred_fallthru
        _
      %p77 = scmp.lt.s32.totalorder %s10, 2
      // Predicated region
      $region13: #{tpu_custom_call.1} parent=5 // pred_check
        %p78 = pneg %p77
      $region14: #{tpu_custom_call.1} parent=5 // pred_check_branch
        %80 = sbr.rel (%p78) target = $region16
      $region15: #{tpu_custom_call.1} parent=5 // pred_region
        // Predicated region
        $region17: #{tpu_custom_call.1} parent=15 // pred_check
          %p81 = pneg %p30
        $region18: #{tpu_custom_call.1} parent=15 // pred_check_branch
          %83 = sbr.rel (%p81) target = $region20
        $region19: #{tpu_custom_call.1} parent=15 // pred_region
          %s84 = sand.u32 %s20, 1
          %s85 = scalar_lea.sflag [#allocation3], %s84
          %s86 = sand.u32 %s20, 1
          %s87 = smul.addr %s86, 8
          %s88 = scalar_lea.vmem [#allocation2], %s87
          %s90 = ssub.s32 128, 128
          %91 = vsyncadd %s85, %s90
          %s92 = smul.addr %s10, 128
          %s93 = scalar_lea.hbm %s0, %s92
          %s95 = sshll.u32 %s88, 4
          %s96 = int_to_ptr.vmem [resolvable:$true] %s95
          %98 = dma.hbm_to_vmem [thread:$0]  %s93, 128, %s96, %s85
        $region20: #{tpu_custom_call.1} parent=15 // pred_fallthru
          _
      $region16: #{tpu_custom_call.1} parent=5 // pred_fallthru
        _
      %p99 = scmp.le.s32.totalorder 1, %s10
      %p100 = scmp.lt.s32.totalorder %s10, 3
      %p101 = pnand %p99, %p100
      %p102 = pneg %p101
      // Predicated region
      $region21: #{tpu_custom_call.1} parent=5 // pred_check
        _
      $region22: #{tpu_custom_call.1} parent=5 // pred_check_branch
        %104 = sbr.rel (%p101) target = $region24
      $region23: #{tpu_custom_call.1} parent=5 // pred_region
        %s105 = ssub.s32 %s10, 1
        %s106 = sand.u32 %s23, 1
        %s107 = scalar_lea.sflag [#allocation3], %s106
        %s108 = sand.u32 %s23, 1
        %s109 = smul.addr %s108, 8
        %s110 = scalar_lea.vmem [#allocation2], %s109
        // Predicated region
        $region25: #{tpu_custom_call.1} parent=23 // pred_check
          %p111 = pneg %p36
        $region26: #{tpu_custom_call.1} parent=23 // pred_check_branch
          %113 = sbr.rel (%p111) target = $region28
        $region27: #{tpu_custom_call.1} parent=23 // pred_region
          %114 = dma.done %s107, 128
        $region28: #{tpu_custom_call.1} parent=23 // pred_fallthru
          _
        %s115 = sand.u32 %s23, 1
        %s116 = scalar_lea.sflag [#allocation3], %s115
        %s117 = sand.u32 %s23, 1
        %s118 = smul.addr %s117, 8
        %s119 = scalar_lea.vmem [#allocation2], %s118
        %p120 = pneg %p36
        %p121 = pneg %p33
        %p122 = pneg %p62
        %p123 = pneg %p59
        %p124 = scmp.lt.s32.totalorder %s15, 1
        %s125 = scalar_select %p124, %s15, 1
        %s126 = smul.addr %s125, 8
        %s127 = scalar_lea.vmem %s1, %s126
        %p128 = scmp.lt.s32.totalorder %s15, 1
        %s129 = scalar_select %p128, %s15, 1
        %s130 = smul.addr %s129, 8
        %s131 = scalar_lea.vmem %s1, %s130
        %v132 = vld [vmem:[%s110] sm:$0xff]
        %v133 = vmul.f32 %v132, %v132
        %vm134 = vcmask 261120
        %v136 = vsel %vm134, 1.0, 0
        %v139 = vsel %vm134, %v133, 0
        %141 = vmatprep.subr.mxu0 0.0
        %142 = vmatpush1.xpose.msra.mxu0 %v139
        %143 = vmatprep.subr.mxu0 0.0
        %144 = vmatpush1.xpose.msra.mxu0 0.0
        %145 = vmatprep.subr.mxu0 0.0
        %146 = vmatpush1.xpose.msra.mxu0 0.0
        %147 = vmatprep.subr.mxu0 0.0
        %148 = vmatpush1.xpose.msra.mxu0 0.0
        %149 = vmatprep.subr.mxu0 0.0
        %150 = vmatpush1.xpose.msra.mxu0 0.0
        %151 = vmatprep.subr.mxu0 0.0
        %152 = vmatpush1.xpose.msra.mxu0 0.0
        %153 = vmatprep.subr.mxu0 0.0
        %154 = vmatpush1.xpose.msra.mxu0 0.0
        %155 = vmatprep.subr.mxu0 0.0
        %156 = vmatpush1.xpose.msra.mxu0 0.0
        %157 = vmatprep.subr.mxu0 0.0
        %158 = vmatpush1.xpose.msra.mxu0 0.0
        %159 = vmatprep.subr.mxu0 0.0
        %160 = vmatpush1.xpose.msra.mxu0 0.0
        %161 = vmatprep.subr.mxu0 0.0
        %162 = vmatpush1.xpose.msra.mxu0 0.0
        %163 = vmatprep.subr.mxu0 0.0
        %164 = vmatpush1.xpose.msra.mxu0 0.0
        %165 = vmatprep.subr.mxu0 0.0
        %166 = vmatpush1.xpose.msra.mxu0 0.0
        %167 = vmatprep.subr.mxu0 0.0
        %168 = vmatpush1.xpose.msra.mxu0 0.0
        %169 = vmatprep.subr.mxu0 0.0
        %170 = vmatpush1.xpose.msra.mxu0 0.0
        %171 = vmatprep.subr.mxu0 0.0
        %172 = vmatpush1.xpose.msra.mxu0 0.0
        %173 = vmatprep.subr.mxu0 0.0
        %174 = vmatpush1.xpose.msra.mxu0 0.0
        %175 = vmatprep.subr.mxu0 0.0
        %176 = vmatpush1.xpose.msra.mxu0 0.0
        %177 = vmatprep.subr.mxu0 0.0
        %178 = vmatpush1.xpose.msra.mxu0 0.0
        %179 = vmatprep.subr.mxu0 0.0
        %180 = vmatpush1.xpose.msra.mxu0 0.0
        %181 = vmatprep.subr.mxu0 0.0
        %182 = vmatpush1.xpose.msra.mxu0 0.0
        %183 = vmatprep.subr.mxu0 0.0
        %184 = vmatpush1.xpose.msra.mxu0 0.0
        %185 = vmatprep.subr.mxu0 0.0
        %186 = vmatpush1.xpose.msra.mxu0 0.0
        %187 = vmatprep.subr.mxu0 0.0
        %188 = vmatpush1.xpose.msra.mxu0 0.0
        %189 = vmatprep.subr.mxu0 0.0
        %190 = vmatpush1.xpose.msra.mxu0 0.0
        %191 = vmatprep.subr.mxu0 0.0
        %192 = vmatpush1.xpose.msra.mxu0 0.0
        %193 = vmatprep.subr.mxu0 0.0
        %194 = vmatpush1.xpose.msra.mxu0 0.0
        %195 = vmatprep.subr.mxu0 0.0
        %196 = vmatpush1.xpose.msra.mxu0 0.0
        %197 = vmatprep.subr.mxu0 0.0
        %198 = vmatpush1.xpose.msra.mxu0 0.0
        %199 = vmatprep.subr.mxu0 0.0
        %200 = vmatpush1.xpose.msra.mxu0 0.0
        %201 = vmatprep.subr.mxu0 0.0
        %202 = vmatpush1.xpose.msra.mxu0 0.0
        %203 = vmatprep.subr.mxu0 0.0
        %204 = vmatpush1.xpose.msra.mxu0 0.0
        %205 = vmatprep.mubr.f32.mxu0 0.0
        %206 = vmatmul.mubr.f32.gmra.mrb[0].mxu0 %v136
        %v207 = vpop.f32.mrb[0].mxu0
        %v208 = vadd.f32 0.0, %v207
        %v209 = vpop.f32.mrb[0].mxu0
        %210 = vdwg.mxu0
        %v211 = vrsqrt.pop %v208
        %v212 = vmul.f32 %v208, %v211
        %vm213 = vcmp.eq.f32.partialorder %v208, inf
        %v214 = vsel %vm213, %v208, %v212
        %vm215 = vcmp.eq.f32.partialorder %v208, 0.0
        %v216 = vand.u32 %v208, 2147483648
        %v217 = vsel %vm215, %v216, %v214
        %v218 = vmax.f32 %v217, 1e-12
        %v219 = vrcp.pop %v218
        %v220 = vmul.f32 %v217, %v219
        %vm221 = vcmask 64512
        %222 = vst.msk [vmem:[%s131] sm:$0xff] %vm221, %v220
        %p223 = scmp.lt.s32.totalorder %s15, 1
        %s224 = scalar_select %p223, %s15, 1
        %s225 = smul.addr %s224, 8
        %s226 = scalar_lea.vmem %s1, %s225
        // Predicated region
        $region29: #{tpu_custom_call.1} parent=23 // pred_check
          %p227 = pneg %p59
        $region30: #{tpu_custom_call.1} parent=23 // pred_check_branch
          %229 = sbr.rel (%p227) target = $region32
        $region31: #{tpu_custom_call.1} parent=23 // pred_region
          _
        $region32: #{tpu_custom_call.1} parent=23 // pred_fallthru
          _
      $region24: #{tpu_custom_call.1} parent=5 // pred_fallthru
        _
      %p230 = scmp.le.s32.totalorder 2, %s10
      // Predicated region
      $region33: #{tpu_custom_call.1} parent=5 // pred_check
        %p231 = pneg %p230
      $region34: #{tpu_custom_call.1} parent=5 // pred_check_branch
        %233 = sbr.rel (%p231) target = $region36
      $region35: #{tpu_custom_call.1} parent=5 // pred_region
        %s234 = ssub.s32 %s10, 2
        // Predicated region
        $region37: #{tpu_custom_call.1} parent=35 // pred_check
          %p235 = pneg %p65
        $region38: #{tpu_custom_call.1} parent=35 // pred_check_branch
          %237 = sbr.rel (%p235) target = $region40
        $region39: #{tpu_custom_call.1} parent=35 // pred_region
          %p238 = scmp.lt.s32.totalorder %s16, 1
          %s239 = scalar_select %p238, %s16, 1
          %s240 = smul.addr %s239, 8
          %s241 = scalar_lea.vmem %s1, %s240
        $region40: #{tpu_custom_call.1} parent=35 // pred_fallthru
          _
      $region36: #{tpu_custom_call.1} parent=5 // pred_fallthru
        _
    $region6: #{tpu_custom_call.1} parent=1 // loop_footer
      %s14 = sadd.s32 1, %s10
    $region7: #{tpu_custom_call.1} parent=1 // loop_footer_branch
      %9 = sbr.rel target = $region3
    $region8: #{tpu_custom_call.1} parent=1 // loop_exit
      _
    %242 = vsyncpa [#allocation3], 1
    %s243 = scalar_lea.sflag [#allocation3], 1
    %244 = vsyncpa %s243, 1

</llo_original>
